<compile_context>
chip_gen: v6e
topology: v6e:2x2x1
jax: 0.10.0
libtpu: 0.0.40
codegen_flags: <defaults>
</compile_context>

<pallas_src>
import functools
import numpy as np

import jax
import jax.numpy as jnp
from jax.experimental import pallas as pl
from jax.experimental.pallas import tpu as pltpu


_SQRT1_2 = 0.7071067811865476


def _pick_tile(dim, preferred, align):
    """Largest tile <= preferred that exactly tiles `dim` (aligned), else full dim."""
    if dim <= preferred:
        return dim
    t = (preferred // align) * align
    while t >= align:
        if dim % t == 0:
            return t
        t -= align
    return dim  # fall back: full dim (always a legal block shape)


# ----------------------------------------------------------------------------
# Prologue kernel: per-tensor symmetric activation quantization -> bf16 codes
# ----------------------------------------------------------------------------
def _quantize_act_kernel(s_ref, x_ref, o_ref):
    # round(x / scale); codes lie in [-127, 127] so bf16 is exact.
    o_ref[...] = jnp.round(x_ref[...] / s_ref[0, 0]).astype(o_ref.dtype)


def quantize_act_pallas(x2d, scale):
    M, K = x2d.shape
    tm = _pick_tile(M, 256, 8)
    tk = _pick_tile(K, 2048, 128)
    return pl.pallas_call(
        _quantize_act_kernel,
        out_shape=jax.ShapeDtypeStruct((M, K), jnp.bfloat16),
        grid_spec=pltpu.PrefetchScalarGridSpec(
            num_scalar_prefetch=0,
            grid=(M // tm, K // tk),
            in_specs=[
                pl.BlockSpec(memory_space=pltpu.SMEM),            # scale (1,1)
                pl.BlockSpec((tm, tk), lambda i, j: (i, j)),      # x
            ],
            out_specs=pl.BlockSpec((tm, tk), lambda i, j: (i, j)),
        ),
        compiler_params=pltpu.CompilerParams(
            dimension_semantics=("parallel", "parallel"),
            vmem_limit_bytes=32 * 1024 * 1024),
    )(scale.reshape(1, 1).astype(jnp.float32), x2d.astype(jnp.float32))


# ----------------------------------------------------------------------------
# Main kernel: quantized matmul + bias + scale (+ GELU, + fused abs-max)
# ----------------------------------------------------------------------------
def _qmatmul_kernel(s_ref, xq_ref, wt_ref, b_ref, o_ref, *rest,
                    apply_gelu, emit_absmax):
    if emit_absmax:
        tmax_ref, acc_ref = rest
    else:
        (acc_ref,) = rest

    k = pl.program_id(2)

    @pl.when(k == 0)
    def _():
        acc_ref[...] = jnp.zeros_like(acc_ref)

    # bf16 x bf16 -> f32 accumulate on the MXU.  Quantized codes are integers
    # <= 127, exact in bf16, so this matches the full-precision math.
    acc_ref[...] += jnp.dot(xq_ref[...], wt_ref[...],
                            preferred_element_type=jnp.float32)

    @pl.when(k == pl.num_programs(2) - 1)
    def _():
        out = acc_ref[...] + b_ref[...].astype(jnp.float32)
        out = out * s_ref[0, 0]                 # s_out = s_x * s_w (pre-multiplied)
        if apply_gelu:
            # exact erf GELU (nn.GELU default); runs on the EUP slot.
            out = 0.5 * out * (1.0 + jax.lax.erf(out * jnp.float32(_SQRT1_2)))
        o_ref[...] = out.astype(o_ref.dtype)
        if emit_absmax:
            # fused abs-max for the next layer's activation quantizer: one
            # (8,128) broadcast tile per (i, j) output block, reduced with a
            # trivial jnp.max in the wrapper.  Avoids an extra HBM pass over h.
            tmax_ref[...] = jnp.full((8, 128), jnp.max(jnp.abs(out)), jnp.float32)


def quantized_matmul_pallas(xq, wt_q, b, s_out, *, apply_gelu=False,
                            emit_absmax=False, tm=None, tn=None, tk=None):
    """xq: (M, K) quantized activation codes (bf16) or raw f32 activations.
       wt_q: (K, N) pre-quantized, pre-transposed weight codes.
       b: (N,) bias.  s_out: scalar = s_x * s_w."""
    M, K = xq.shape
    K2, N = wt_q.shape
    assert K == K2

    # Default tiles: large enough to amortize per-step overhead and keep the
    # output lane-dense, small enough to double-buffer inside v7x's 32 MiB
    # scoped VMEM (v5e/v6e have more headroom).
    tm = _pick_tile(M, 256, 8) if tm is None else tm
    tn = _pick_tile(N, 512, 128) if tn is None else tn
    tk = _pick_tile(K, 512, 128) if tk is None else tk
    assert M % tm == 0 and N % tn == 0 and K % tk == 0

    # per-step VMEM working set: double-buffered inputs + output + f32 acc
    vmem_bytes = (2 * (tm * tk * xq.dtype.itemsize + tk * tn * wt_q.dtype.itemsize)
                  + 2 * tm * tn * 4 + tm * tn * 4)
    assert vmem_bytes < 28 * 1024 * 1024, "tile configuration would overflow VMEM"

    n_i, n_j = M // tm, N // tn
    grid = (n_i, n_j, K // tk)

    b2d = b.reshape(1, N).astype(jnp.float32)
    s2d = jnp.asarray(s_out, jnp.float32).reshape(1, 1)

    in_specs = [
        pl.BlockSpec(memory_space=pltpu.SMEM),               # s_out (1,1)
        pl.BlockSpec((tm, tk), lambda i, j, k: (i, k)),      # x codes
        pl.BlockSpec((tk, tn), lambda i, j, k: (k, j)),      # w.T codes
        pl.BlockSpec((1, tn), lambda i, j, k: (0, j)),       # bias
    ]
    out_spec_main = pl.BlockSpec((tm, tn), lambda i, j, k: (i, j))

    if emit_absmax:
        out_shape = (jax.ShapeDtypeStruct((M, N), jnp.float32),
                     jax.ShapeDtypeStruct((n_i * 8, n_j * 128), jnp.float32))
        out_specs = (out_spec_main,
                     pl.BlockSpec((8, 128), lambda i, j, k: (i, j)))
    else:
        out_shape = jax.ShapeDtypeStruct((M, N), jnp.float32)
        out_specs = out_spec_main

    kernel = functools.partial(_qmatmul_kernel, apply_gelu=apply_gelu,
                               emit_absmax=emit_absmax)

    res = pl.pallas_call(
        kernel,
        out_shape=out_shape,
        grid_spec=pltpu.PrefetchScalarGridSpec(
            num_scalar_prefetch=0,
            grid=grid,
            in_specs=in_specs,
            out_specs=out_specs,
            scratch_shapes=[pltpu.VMEM((tm, tn), jnp.float32)],
        ),
        compiler_params=pltpu.CompilerParams(
            dimension_semantics=("parallel", "parallel", "arbitrary"),
            vmem_limit_bytes=32 * 1024 * 1024),
    )(s2d, xq, wt_q, b2d)

    if emit_absmax:
        o, tmax = res
        return o, jnp.max(tmax)
    return res, None


# ----------------------------------------------------------------------------
# Parameter preprocessing helpers
# ----------------------------------------------------------------------------
def _prequantize_weight(w, wbits):
    """Per-tensor symmetric weight quantization done ONCE; returns (s_w, w.T codes)."""
    if wbits is None:
        return jnp.float32(1.0), jnp.asarray(w, jnp.float32).T
    Qp = 2 ** (wbits - 1) - 1
    s = (jnp.maximum(jnp.max(jnp.abs(w)), 1e-6) / Qp).astype(jnp.float32)
    wq = jnp.round(w.astype(jnp.float32) / s)
    return s, wq.T.astype(jnp.bfloat16)       # codes <= 127 -> exact in bf16


def _act_scale_from_max(max_abs, abits):
    if abits is None:
        return jnp.float32(1.0)
    Qp = 2 ** (abits - 1) - 1
    return (jnp.maximum(max_abs, 1e-6) / Qp).astype(jnp.float32)


# ----------------------------------------------------------------------------
# Mlp module (forward only)
# ----------------------------------------------------------------------------
class MlpPallas:
    def __init__(self, key, in_features, hidden_features, abits, wbits):
        self.abits = abits
        self.wbits = wbits
        out_features = in_features
        k1, k2, k3, k4 = jax.random.split(key, 4)
        # nn.Linear default init: U(-1/sqrt(fan_in), 1/sqrt(fan_in))
        lim1 = 1.0 / np.sqrt(in_features)
        lim2 = 1.0 / np.sqrt(hidden_features)
        self.w1 = jax.random.uniform(k1, (hidden_features, in_features),
                                     jnp.float32, -lim1, lim1)
        self.b1 = jax.random.uniform(k2, (hidden_features,), jnp.float32, -lim1, lim1)
        self.w2 = jax.random.uniform(k3, (out_features, hidden_features),
                                     jnp.float32, -lim2, lim2)
        self.b2 = jax.random.uniform(k4, (out_features,), jnp.float32, -lim2, lim2)

        # pre-quantize + pre-transpose weights once (reused every forward)
        self.s_w1, self.w1_t_q = _prequantize_weight(self.w1, wbits)
        self.s_w2, self.w2_t_q = _prequantize_weight(self.w2, wbits)

    def __call__(self, x):
        B, N, C = x.shape
        x2d = x.reshape(B * N, C)

        # ---- fc1 (+ fused GELU + fused abs-max of h for fc2's quantizer) ----
        s_x1 = _act_scale_from_max(jnp.max(jnp.abs(x2d)), self.abits)
        if self.abits is not None:
            xq1 = quantize_act_pallas(x2d, s_x1)
        else:
            xq1 = x2d.astype(jnp.float32)
        h, h_absmax = quantized_matmul_pallas(
            xq1, self.w1_t_q, self.b1, s_x1 * self.s_w1,
            apply_gelu=True, emit_absmax=(self.abits is not None))

        # ---- fc2 ----
        if self.abits is not None:
            s_h = _act_scale_from_max(h_absmax, self.abits)
            hq = quantize_act_pallas(h, s_h)
        else:
            s_h = jnp.float32(1.0)
            hq = h
        y, _ = quantized_matmul_pallas(
            hq, self.w2_t_q, self.b2, s_h * self.s_w2,
            apply_gelu=False, emit_absmax=False)
        return y.reshape(B, N, -1)


# ----------------------------------------------------------------------------
# Pure-JAX reference (same math, no Pallas) for a sanity check
# ----------------------------------------------------------------------------
def _ref_qlinear(x2d, w, b, a_bits, w_bits):
    def q(t, n_bits):
        if n_bits is None:
            return t, jnp.float32(1.0)
        Qp = 2 ** (n_bits - 1) - 1
        s = jnp.maximum(jnp.max(jnp.abs(t)), 1e-6) / Qp
        return jnp.round(t / s), s
    xq, sx = q(x2d, a_bits)
    wq, sw = q(w, w_bits)
    out = xq @ wq.T + b[None, :]
    return out * (sx * sw)


def _ref_mlp(mlp, x):
    B, N, C = x.shape
    x2d = x.reshape(B * N, C)
    h = _ref_qlinear(x2d, mlp.w1, mlp.b1, mlp.abits, mlp.wbits)
    h = 0.5 * h * (1.0 + jax.lax.erf(h * jnp.float32(_SQRT1_2)))
    y = _ref_qlinear(h, mlp.w2, mlp.b2, mlp.abits, mlp.wbits)
    return y.reshape(B, N, -1)


if __name__ == "__main__":
    key = jax.random.PRNGKey(0)
    k_x, k_p = jax.random.split(key)

    B, N = 2, 8                # batch, tokens
    in_features = 128
    hidden_features = 256
    abits, wbits = 8, 8        # per-tensor symmetric quantization bits

    x = jax.random.normal(k_x, (B, N, in_features), jnp.float32)

    mlp = MlpPallas(k_p, in_features, hidden_features, abits, wbits)

    out = jax.block_until_ready(mlp(x))
    ref = jax.block_until_ready(_ref_mlp(mlp, x))

    assert out.shape == (B, N, in_features)
    np.testing.assert_allclose(np.asarray(out), np.asarray(ref), rtol=2e-4, atol=2e-4)

    print("KERNEL_OK")
</pallas_src>

<mosaic_0001>
module attributes {stable_mosaic.version = 11 : i64} {
  func.func @_quantize_act_kernel(%arg0: i32, %arg1: i32, %arg2: memref<1x1xf32, #tpu.memory_space<smem>>, %arg3: memref<16x128xf32, #tpu.memory_space<vmem>>, %arg4: memref<16x128xbf16, #tpu.memory_space<vmem>>) attributes {dimension_semantics = [#tpu.dimension_semantics<parallel>, #tpu.dimension_semantics<parallel>], iteration_bounds = array<i64: 1, 1>, scalar_prefetch = 0 : i64, scratch_operands = 0 : i64, tpu.core_type = #tpu.core_type<tc>, window_params = [{transform_indices = @transform_0, window_bounds = array<i64: 1, 1>}, {transform_indices = @transform_1, window_bounds = array<i64: 16, 128>}, {transform_indices = @transform_2, window_bounds = array<i64: 16, 128>}]} {
    %c0 = arith.constant 0 : index
    %c0_0 = arith.constant 0 : index
    %0 = vector.load %arg3[%c0, %c0_0] : memref<16x128xf32, #tpu.memory_space<vmem>>, vector<16x128xf32>
    %c0_1 = arith.constant 0 : index
    %c0_2 = arith.constant 0 : index
    %1 = memref.load %arg2[%c0_1, %c0_2] : memref<1x1xf32, #tpu.memory_space<smem>>
    %2 = vector.broadcast %1 : f32 to vector<16x128xf32>
    %3 = arith.divf %0, %2 : vector<16x128xf32>
    %4 = math.roundeven %3 : vector<16x128xf32>
    %5 = arith.truncf %4 : vector<16x128xf32> to vector<16x128xbf16>
    %c0_3 = arith.constant 0 : index
    %c0_4 = arith.constant 0 : index
    %6 = vector.load %arg4[%c0_3, %c0_4] : memref<16x128xbf16, #tpu.memory_space<vmem>>, vector<16x128xbf16>
    tpu.vector_store %arg4[%c0_3, %c0_4], %5 {strides = array<i32>} : memref<16x128xbf16, #tpu.memory_space<vmem>>, vector<16x128xbf16>,
    return
  }
  func.func @transform_0(%arg0: i32, %arg1: i32) -> (i32, i32) {
    %c0_i32 = arith.constant 0 : i32
    %c0_i32_0 = arith.constant 0 : i32
    %c0_i32_1 = arith.constant 0 : i32
    return %c0_i32, %c0_i32_0 : i32, i32
  }
  func.func @transform_1(%arg0: i32, %arg1: i32) -> (i32, i32) {
    %c0_i32 = arith.constant 0 : i32
    return %arg0, %arg1 : i32, i32
  }
  func.func @transform_2(%arg0: i32, %arg1: i32) -> (i32, i32) {
    %c0_i32 = arith.constant 0 : i32
    return %arg0, %arg1 : i32, i32
  }
}

</mosaic_0001>

<llo_original>
// kernel: tpu_custom_call.1
$region0: #{tpu_custom_call.1}
  #allocation0 [shape = 'u32[]', space=smem, size = 0x4, offset = 0x4, fixed_abs, tag = 'smem constant byte address 0x4 - core index']
  #allocation1 [shape = 'u32[144,128]{1,0:T(1,128)}', space=vmem, size = 0x12000, scoped, tag = 'internal scratch']
  #allocation2 [shape = 'f32[1,1]{1,0:T(1,128)S(6)}', space=smem, size = 0x200, scoped, tag = 'scoped memory for tpu_custom_call.1']
  %s0 = inlined_call_operand.<no memory space> [shape: f32[1,1], index: 0, kind: input, shape index: {}]
  %s1 = inlined_call_operand.hbm [shape: f32[16,128], index: 1, kind: input, shape index: {}]
  %s2 = inlined_call_operand.hbm [shape: bf16[16,128], index: 2, kind: output, shape index: {}]
  %s3 = sld [smem:[#allocation0]]
  $region22: #{tpu_custom_call.1} parent=0
    _
  %s5 = ssub.s32 1, %s3
  %s6 = scalar_select 0, %s5, %s3
  %7 = sst [smem:[#allocation2]] %s0
  $region1: #{tpu_custom_call.1} parent=0
    #allocation3 [shape = 'u8[8192]{0}', space=vmem, size = 0x2000, scoped, tag = 'input window, operand 1, single buffered']
    #allocation4 [shape = 's32[1]{0}', space=sflag, size = 0x4, scoped, tag = 'scoped memory for tpu_custom_call.1']
    #allocation5 [shape = 's32[1]{0}', space=sflag, size = 0x4, scoped, tag = 'scoped memory for tpu_custom_call.1']
    #allocation6 [shape = 'u8[4096]{0}', space=vmem, size = 0x1000, scoped, tag = 'output window, operand 0, single buffered']
    %8 = vsyncpa [#allocation4], 0
    %9 = vsyncpa [#allocation5], 0
    // Predicated region
    $region2: #{tpu_custom_call.1} parent=1 // pred_check
      _
    $region3: #{tpu_custom_call.1} parent=1 // pred_check_branch
      %11 = sbr.rel (0) target = $region5
    $region4: #{tpu_custom_call.1} parent=1 // pred_region
      _
    $region5: #{tpu_custom_call.1} parent=1 // pred_fallthru
      _
    // Predicated region
    $region6: #{tpu_custom_call.1} parent=1 // pred_check
      _
    $region7: #{tpu_custom_call.1} parent=1 // pred_check_branch
      %13 = sbr.rel (0) target = $region9
    $region8: #{tpu_custom_call.1} parent=1 // pred_region
      %s15 = ssub.s32 256, 256
      %16 = vsyncadd [#allocation4], %s15
      %s17 = sshll.u32 [#allocation3], 4
      %s18 = int_to_ptr.vmem [resolvable:$true] %s17
      %23 = dma.hbm_to_vmem [thread:$0]  %s1, 256, %s18, [#allocation4], 128, 128, 8
    $region9: #{tpu_custom_call.1} parent=1 // pred_fallthru
      _
    // Predicated region
    $region10: #{tpu_custom_call.1} parent=1 // pred_check
      _
    $region11: #{tpu_custom_call.1} parent=1 // pred_check_branch
      %25 = sbr.rel (0) target = $region13
    $region12: #{tpu_custom_call.1} parent=1 // pred_region
      %26 = dma.done [#allocation4], 256
    $region13: #{tpu_custom_call.1} parent=1 // pred_fallthru
      _
    %v27 = vld [vmem:[#allocation3] sm:$0xff]
    %v28 = vld [vmem:[#allocation3 + $0x8] sm:$0xff]
    %s29 = sld [smem:[#allocation2]]
    %v30 = vstv %s29
    %v31 = vrcp.pop %v30
    %v32 = vmul.f32 %v27, %v31
    %v33 = vmul.f32 %v28, %v31
    %v34 = vround.ne.pseudo %v32
    %v35 = vround.ne.pseudo %v33
    %v36 = vpack.c.bf16 %v35, %v34
    %v38 = vunpack.c.l.b16 %v36
    %v39 = vunpack.c.h.b16 %v36
    %v40 = vpack.c.b16 %v38, %v38
    %v41 = vpack.c.b16 %v39, %v39
    %44 = vst [vmem:[#allocation6] sm:$0xf] %v40
    %45 = vst [vmem:[#allocation6 + $0x4] sm:$0xf] %v41
    // Predicated region
    $region14: #{tpu_custom_call.1} parent=1 // pred_check
      _
    $region15: #{tpu_custom_call.1} parent=1 // pred_check_branch
      %47 = sbr.rel (0) target = $region17
    $region16: #{tpu_custom_call.1} parent=1 // pred_region
      %s49 = ssub.s32 128, 128
      %50 = vsyncadd [#allocation5], %s49
      %s51 = sshll.u32 [#allocation6], 4
      %s52 = int_to_ptr.vmem [resolvable:$true] %s51
      %57 = dma.vmem_to_hbm [thread:$0]  %s52, 128, %s2, [#allocation5], 64, 64, 4
    $region17: #{tpu_custom_call.1} parent=1 // pred_fallthru
      _
    // Predicated region
    $region18: #{tpu_custom_call.1} parent=1 // pred_check
      _
    $region19: #{tpu_custom_call.1} parent=1 // pred_check_branch
      %59 = sbr.rel (0) target = $region21
    $region20: #{tpu_custom_call.1} parent=1 // pred_region
      %60 = dma.done [#allocation5], 128
    $region21: #{tpu_custom_call.1} parent=1 // pred_fallthru
      _
    %61 = vsyncpa [#allocation4], 1
    %62 = vsyncpa [#allocation5], 1

</llo_original>
